<compile_context>
chip_gen: v5e
topology: v5e:2x2
jax: 0.10.0
libtpu: 0.0.40
codegen_flags: <defaults>
</compile_context>

<pallas_src>
import io
import re
from functools import partial

import numpy as np

import jax
import jax.numpy as jnp
from jax.experimental import pallas as pl
from jax.experimental.pallas import tpu as pltpu


# -----------------------------------------------------------------------------
# Pallas identity kernel (the forward's only tensor computation: return x)
# -----------------------------------------------------------------------------
_COL_CANDIDATES = (1024, 512, 256, 128)      # lane-dense widths (multiples of 128)
_TARGET_TILE_BYTES = 4 * 1024 * 1024         # ~4 MiB tiles -> ~16 MiB resident VMEM
_VMEM_LIMIT_BYTES = 32 * 1024 * 1024         # explicit budget; safe on v5e/v6e/v7x


def _identity_kernel(x_ref, o_ref):
    o_ref[...] = x_ref[...]


def _pick_cols(total: int):
    """Largest lane-dense width that divides the element count (no padding)."""
    for c in _COL_CANDIDATES:
        if total % c == 0:
            return c
    return None


@partial(jax.jit, static_argnames=("rows", "cols", "block_rows"), donate_argnums=(0,))
def _identity_copy(x, *, rows, cols, block_rows):
    """Jit-ed, donated, lane-dense Pallas identity copy of `x`."""
    itemsize = jnp.dtype(x.dtype).itemsize
    slab = x.reshape(rows, cols)                       # bitcast reshape, no traffic
    grid = (pl.cdiv(rows, block_rows),)
    spec = pl.BlockSpec((block_rows, cols), lambda i: (i, 0))

    out = pl.pallas_call(
        _identity_kernel,
        out_shape=jax.ShapeDtypeStruct(slab.shape, slab.dtype),
        grid=grid,
        in_specs=[spec],
        out_specs=spec,
        # Semantic identity + donated input: reuse the HBM buffer in place.
        input_output_aliases={0: 0},
        compiler_params=pltpu.CompilerParams(
            dimension_semantics=("parallel",),          # both TCs on v7x
            vmem_limit_bytes=_VMEM_LIMIT_BYTES,
        ),
        cost_estimate=pl.CostEstimate(
            flops=0,
            transcendentals=0,
            bytes_accessed=2 * rows * cols * itemsize,  # pure memory op
        ),
    )(slab)
    return out.reshape(x.shape)


def pallas_identity(x: jax.Array) -> jax.Array:
    """Identity pass-through of an arbitrary-rank tensor via a lane-dense,
    flat-tiled Pallas TPU copy (no pad/slice round-trips).

    NOTE: the input buffer is donated to the jit-ed call; callers should use the
    returned array (which is the point of an identity forward) rather than the
    original handle.
    """
    total = x.size
    if total == 0:
        return x

    cols = _pick_cols(total)
    if cols is None:
        # TODO(synk): element count not divisible by 128 — a device copy here
        # would only add pad+copy+slice HBM traffic for a semantic no-op, so we
        # return x unchanged (exactly the module's semantics).
        return x

    rows = total // cols
    itemsize = jnp.dtype(x.dtype).itemsize

    # Row block sized for ~4 MiB tiles, multiple of 8 sublanes. If the whole
    # slab is smaller than one tile, use the full slab (full-extent blocks are
    # exempt from the (8,128) divisibility rule).
    max_block_rows = max(8, (_TARGET_TILE_BYTES // (cols * itemsize)) // 8 * 8)
    block_rows = rows if rows <= max_block_rows else max_block_rows

    return _identity_copy(x, rows=rows, cols=cols, block_rows=block_rows)


# -----------------------------------------------------------------------------
# Layer_Attr re-implementation (host-side glue is plain Python; tensor path is
# the Pallas identity kernel above)
# -----------------------------------------------------------------------------
class LayerAttr:
    def __init__(self, is_conv, info, name, file):
        self.is_conv = is_conv
        self.info = info
        self.name = name[:-7].replace(".", "_")
        self.f = file

    def forward(self, x):
        # TODO(synk): regex parsing / CSV writing is host-side string IO with no
        # Pallas equivalent; kept in Python exactly mirroring the PyTorch code.
        if self.is_conv:
            if len(list(x.shape)) != 4:
                raise SystemExit(
                    "Error: expected a shape of 4 for conv IFMAP, but got shape: "
                    + str(x.shape)
                )
            ifmap_h = list(x.shape)[2]
            ifmap_w = list(x.shape)[3]
            m = re.compile(r"kernel_size=\((\d+), (\d+)\)").search(self.info)
            if m is None:
                raise SystemExit(
                    "Error: couldn't find kernel size match in string: " + str(self.info)
                )
            filter_h, filter_w = m.group(1), m.group(2)
            m = re.compile(r"Conv2d\((\d+), (\d+)").search(self.info)
            if m is None:
                raise SystemExit(
                    "Error: couldn't find channels/num_filters in string: " + str(self.info)
                )
            channels, num_filter = m.group(1), m.group(2)
            m = re.compile(r"stride=\((\d+)").search(self.info)
            if m is None:
                raise SystemExit(
                    "Error: couldn't find strides in string: " + str(self.info)
                )
            strides = m.group(1)
        else:
            ifmap_h = 1
            ifmap_w = 1
            filter_h = 1
            filter_w = 1
            m = re.compile(r"in_features=(\d+)").search(self.info)
            if m is None:
                raise SystemExit(
                    "Error: couldn't find channels in string: " + str(self.info)
                )
            channels = m.group(1)
            m = re.compile(r"out_features=(\d+)").search(self.info)
            if m is None:
                raise SystemExit(
                    "Error: couldn't find num_filter in string: " + str(self.info)
                )
            num_filter = m.group(1)
            strides = 1

        print(
            self.name + ",",
            str(ifmap_h) + ",",
            str(ifmap_w) + ",",
            str(filter_h) + ",",
            str(filter_w) + ",",
            str(channels) + ",",
            str(num_filter) + ",",
            str(strides) + ",",
            file=self.f,
        )

        # Tensor path: identity, executed on-TPU through the Pallas kernel.
        return pallas_identity(x)

    __call__ = forward


if __name__ == "__main__":
    key = jax.random.PRNGKey(0)
    # Conv-style IFMAP, NCHW, matching the module's conv branch expectations.
    x = jax.random.normal(key, (2, 4, 16, 16), dtype=jnp.float32)

    # Host copy for verification: x's device buffer is donated to the kernel.
    x_host = np.asarray(x)

    csv_sink = io.StringIO()  # in-memory "file" — no filesystem IO
    layer = LayerAttr(
        is_conv=True,
        info="Conv2d(4, 8, kernel_size=(3, 3), stride=(1, 1), padding=(1, 1))",
        name="features.0.weight",
        file=csv_sink,
    )

    y = layer(x)
    y = jax.block_until_ready(y)

    # Sanity: forward is an exact identity and the CSV row was produced.
    assert y.shape == x_host.shape and y.dtype == x_host.dtype
    assert np.array_equal(np.asarray(y), x_host)
    assert csv_sink.getvalue().startswith("features_0, 16, 16, 3, 3, 4, 8, 1,")

    print("KERNEL_OK")
</pallas_src>

<mosaic_0001>
module attributes {stable_mosaic.version = 11 : i64} {
  func.func @_identity_kernel(%arg0: i32, %arg1: memref<2x1024xf32, #tpu.memory_space<vmem>>, %arg2: memref<2x1024xf32, #tpu.memory_space<vmem>>) attributes {dimension_semantics = [#tpu.dimension_semantics<parallel>], iteration_bounds = array<i64: 1>, scalar_prefetch = 0 : i64, scratch_operands = 0 : i64, tpu.core_type = #tpu.core_type<tc>, window_params = [{transform_indices = @transform_0, window_bounds = array<i64: 2, 1024>}, {transform_indices = @transform_1, window_bounds = array<i64: 2, 1024>}]} {
    %c0 = arith.constant 0 : index
    %c0_0 = arith.constant 0 : index
    %0 = vector.load %arg1[%c0, %c0_0] : memref<2x1024xf32, #tpu.memory_space<vmem>>, vector<2x1024xf32>
    %c0_1 = arith.constant 0 : index
    %c0_2 = arith.constant 0 : index
    %1 = vector.load %arg2[%c0_1, %c0_2] : memref<2x1024xf32, #tpu.memory_space<vmem>>, vector<2x1024xf32>
    tpu.vector_store %arg2[%c0_1, %c0_2], %0 {strides = array<i32>} : memref<2x1024xf32, #tpu.memory_space<vmem>>, vector<2x1024xf32>,
    return
  }
  func.func @transform_0(%arg0: i32) -> (i32, i32) {
    %c0_i32 = arith.constant 0 : i32
    %c0_i32_0 = arith.constant 0 : i32
    return %arg0, %c0_i32 : i32, i32
  }
  func.func @transform_1(%arg0: i32) -> (i32, i32) {
    %c0_i32 = arith.constant 0 : i32
    %c0_i32_0 = arith.constant 0 : i32
    return %arg0, %c0_i32 : i32, i32
  }
}

</mosaic_0001>

<llo_original>
// kernel: _identity_copy.1
$region0: #{_identity_copy.1}
  #allocation0 [shape = 'u32[]', space=smem, size = 0x4, offset = 0x4, fixed_abs, tag = 'smem constant byte address 0x4 - core index']
  #allocation1 [shape = 'u32[72,128]{1,0:T(1,128)}', space=vmem, size = 0x9000, scoped, tag = 'internal scratch']
  %s0 = inlined_call_operand.vmem [shape: f32[2,1024], index: 0, kind: input, shape index: {}, may-alias: {0,1}]
  %s1 = inlined_call_operand.vmem [shape: f32[2,1024], index: 1, kind: output, shape index: {}, may-alias: {0,1}]
  %s2 = sld [smem:[#allocation0]]
  $region14: #{_identity_copy.1} parent=0
    _
  %s4 = ssub.s32 1, %s2
  %s5 = scalar_select 0, %s4, %s2
  // Predicated region
  $region2: #{_identity_copy.1} parent=0 // pred_check
    _
  $region3: #{_identity_copy.1} parent=0 // pred_check_branch
    %7 = sbr.rel (0) target = $region5
  $region4: #{_identity_copy.1} parent=0 // pred_region
    _
  $region5: #{_identity_copy.1} parent=0 // pred_fallthru
    _
  %v8 = vld [vmem:[%s0] sm:$0xff]
  %v9 = vld [vmem:[%s0 + $0x8] sm:$0xff]
  %10 = vst [vmem:[%s1] sm:$0xff] %v8
  %11 = vst [vmem:[%s1 + $0x8] sm:$0xff] %v9
  // Predicated region
  $region6: #{_identity_copy.1} parent=0 // pred_check
    _
  $region7: #{_identity_copy.1} parent=0 // pred_check_branch
    %13 = sbr.rel (0) target = $region9
  $region8: #{_identity_copy.1} parent=0 // pred_region
    _
  $region9: #{_identity_copy.1} parent=0 // pred_fallthru
    _
  // Predicated region
  $region10: #{_identity_copy.1} parent=0 // pred_check
    _
  $region11: #{_identity_copy.1} parent=0 // pred_check_branch
    %15 = sbr.rel (0) target = $region13
  $region12: #{_identity_copy.1} parent=0 // pred_region
    _
  $region13: #{_identity_copy.1} parent=0 // pred_fallthru
    _

</llo_original>
